<compile_context>
chip_gen: v7x
topology: tpu7x:2x2x1
jax: 0.10.0
libtpu: 0.0.40
codegen_flags: <defaults>
</compile_context>

<pallas_src>
import jax
import jax.numpy as jnp
from jax.experimental import pallas as pl
from jax.experimental.pallas import tpu as pltpu


# ----------------------------- Pallas kernel ------------------------------ #
def ncf_kernel(
    ug_ref,    # [E, TB]  user GMF embedding (batch on lanes), bf16
    ig_ref,    # [E, TB]  item GMF embedding
    um_ref,    # [E, TB]  user MLP embedding
    im_ref,    # [E, TB]  item MLP embedding
    w1u_ref,   # [L1, E]  layer-1 weight, user half   (torch [out, in] layout)
    w1i_ref,   # [L1, E]  layer-1 weight, item half
    b1_ref,    # [L1, 1]  f32
    w2_ref,    # [L2, L1]
    b2_ref,    # [L2, 1]
    w3_ref,    # [L3, L2]
    b3_ref,    # [L3, 1]
    wpg_ref,   # [E, 1]   prediction weight, GMF part
    wpm_ref,   # [L3, 1]  prediction weight, MLP part
    bp_ref,    # [1, 1]   prediction bias (SMEM)
    out_ref,   # [1, TB]  f32 (lane-dense)
):
    f32 = jnp.float32

    # GMF branch (VPU): elementwise product of user/item embeddings.
    gmf = ug_ref[...].astype(f32) * ig_ref[...].astype(f32)            # [E, TB]

    # MLP tower, batch on lanes: y = W @ x + b.
    # Layer 1 == Linear(concat([user_mlp, item_mlp])) as a split matmul.
    h = jnp.dot(w1u_ref[...].astype(f32), um_ref[...].astype(f32),
                preferred_element_type=f32)
    h = h + jnp.dot(w1i_ref[...].astype(f32), im_ref[...].astype(f32),
                    preferred_element_type=f32)
    h = jnp.maximum(h + b1_ref[...], 0.0)                              # [L1, TB]
    h = jnp.dot(w2_ref[...].astype(f32), h, preferred_element_type=f32)
    h = jnp.maximum(h + b2_ref[...], 0.0)                              # [L2, TB]
    h = jnp.dot(w3_ref[...].astype(f32), h, preferred_element_type=f32)
    h = jnp.maximum(h + b3_ref[...], 0.0)                              # [L3, TB]

    # Prediction head: VPU multiply + sublane (XLU) reduce — avoids N=1 MXU
    # matmuls and directly yields a lane-dense [1, TB] row.
    logit = jnp.sum(gmf * wpg_ref[...].astype(f32), axis=0, keepdims=True)
    logit = logit + jnp.sum(h * wpm_ref[...].astype(f32), axis=0, keepdims=True)
    logit = logit + bp_ref[0, 0]
    out_ref[...] = jax.nn.sigmoid(logit)


# ------------------------------- wrapper ----------------------------------- #
def ncf_forward(params, user_indices, item_indices, *, batch_tile=4096):
    """NCF forward: XLA embedding gathers + one gridded Pallas kernel."""
    B = int(user_indices.shape[0])
    E = params["user_emb_gmf"].shape[1]
    L1 = params["w1u"].shape[0]
    L2 = params["w2"].shape[0]
    L3 = params["w3"].shape[0]

    # Pad batch up to a multiple of the (lane-aligned) tile size.
    m128 = -(-B // 128) * 128
    tb = min(batch_tile, m128)            # tb stays a multiple of 128
    b_pad = -(-B // tb) * tb
    pad = b_pad - B
    u_idx = jnp.pad(user_indices, (0, pad))   # pad with index 0 (valid row)
    i_idx = jnp.pad(item_indices, (0, pad))

    # Embedding gathers (XLA glue); present batch on the lane axis.
    ug = jnp.take(params["user_emb_gmf"], u_idx, axis=0).T   # [E, b_pad]
    ig = jnp.take(params["item_emb_gmf"], i_idx, axis=0).T
    um = jnp.take(params["user_emb_mlp"], u_idx, axis=0).T
    im = jnp.take(params["item_emb_mlp"], i_idx, axis=0).T

    stream_spec = pl.BlockSpec((E, tb), lambda i: (0, i))
    const = lambda shape: pl.BlockSpec(shape, lambda i: (0, 0))  # VMEM-resident

    emb_bytes = jnp.dtype(ug.dtype).itemsize
    flops = 2 * b_pad * (2 * E * L1 + L1 * L2 + L2 * L3 + E + L3)
    bytes_accessed = 4 * b_pad * E * emb_bytes + 4 * b_pad  # streams in + f32 logits out

    out = pl.pallas_call(
        ncf_kernel,
        out_shape=jax.ShapeDtypeStruct((1, b_pad), jnp.float32),
        grid=(b_pad // tb,),
        in_specs=[
            stream_spec, stream_spec, stream_spec, stream_spec,
            const((L1, E)), const((L1, E)), const((L1, 1)),
            const((L2, L1)), const((L2, 1)),
            const((L3, L2)), const((L3, 1)),
            const((E, 1)), const((L3, 1)),
            pl.BlockSpec((1, 1), lambda i: (0, 0),
                         memory_space=pltpu.MemorySpace.SMEM),
        ],
        out_specs=pl.BlockSpec((1, tb), lambda i: (0, i)),
        compiler_params=pltpu.CompilerParams(
            dimension_semantics=("parallel",),
        ),
        cost_estimate=pl.CostEstimate(
            flops=int(flops),
            transcendentals=int(b_pad),
            bytes_accessed=int(bytes_accessed),
        ),
    )(ug, ig, um, im,
      params["w1u"], params["w1i"], params["b1"],
      params["w2"], params["b2"],
      params["w3"], params["b3"],
      params["wp_gmf"], params["wp_mlp"], params["bp"])

    return out.reshape(-1)[:B]   # predict.view(-1)


# --------------------------- parameter creation ---------------------------- #
def init_params(key, num_users, num_items, embedding_dim=32, layers=(64, 32, 16),
                param_dtype=jnp.bfloat16):
    """Matches NCFModel._init_weights: embeddings ~ N(0, 0.01),
    linear weights kaiming_uniform_(a=0) => bound = sqrt(6/fan_in), biases zero.
    Weights kept in torch [out, in] layout (kernel computes y = W @ x + b)."""
    ks = jax.random.split(key, 8)
    E = embedding_dim
    L1, L2, L3 = layers
    p = {}

    def emb(k, n):
        return (0.01 * jax.random.normal(k, (n, E), jnp.float32)).astype(param_dtype)

    p["user_emb_gmf"] = emb(ks[0], num_users)
    p["item_emb_gmf"] = emb(ks[1], num_items)
    p["user_emb_mlp"] = emb(ks[2], num_users)
    p["item_emb_mlp"] = emb(ks[3], num_items)

    def kaiming_uniform(k, out_f, in_f):
        bound = (6.0 / in_f) ** 0.5           # gain=sqrt(2), bound=gain*sqrt(3/fan_in)
        return jax.random.uniform(k, (out_f, in_f), jnp.float32, -bound, bound)

    w1 = kaiming_uniform(ks[4], L1, 2 * E)
    p["w1u"] = w1[:, :E].astype(param_dtype)          # [L1, E]
    p["w1i"] = w1[:, E:].astype(param_dtype)          # [L1, E]
    p["b1"] = jnp.zeros((L1, 1), jnp.float32)
    p["w2"] = kaiming_uniform(ks[5], L2, L1).astype(param_dtype)
    p["b2"] = jnp.zeros((L2, 1), jnp.float32)
    p["w3"] = kaiming_uniform(ks[6], L3, L2).astype(param_dtype)
    p["b3"] = jnp.zeros((L3, 1), jnp.float32)

    wp = kaiming_uniform(ks[7], 1, E + L3)            # [1, E + L3]
    p["wp_gmf"] = wp[:, :E].T.astype(param_dtype)     # [E, 1]
    p["wp_mlp"] = wp[:, E:].T.astype(param_dtype)     # [L3, 1]
    p["bp"] = jnp.zeros((1, 1), jnp.float32)
    return p


# ------------------------------ reference ---------------------------------- #
def ncf_reference(params, user_indices, item_indices):
    f32 = jnp.float32
    hi = jax.lax.Precision.HIGHEST
    ug = params["user_emb_gmf"][user_indices].astype(f32)
    ig = params["item_emb_gmf"][item_indices].astype(f32)
    gmf = ug * ig
    um = params["user_emb_mlp"][user_indices].astype(f32)
    im = params["item_emb_mlp"][item_indices].astype(f32)
    x = jnp.concatenate([um, im], axis=1)
    w1 = jnp.concatenate([params["w1u"], params["w1i"]], axis=1).astype(f32)
    x = jax.nn.relu(jnp.dot(x, w1.T, precision=hi) + params["b1"].reshape(1, -1))
    x = jax.nn.relu(jnp.dot(x, params["w2"].astype(f32).T, precision=hi)
                    + params["b2"].reshape(1, -1))
    x = jax.nn.relu(jnp.dot(x, params["w3"].astype(f32).T, precision=hi)
                    + params["b3"].reshape(1, -1))
    logit = (jnp.dot(gmf, params["wp_gmf"].astype(f32), precision=hi)
             + jnp.dot(x, params["wp_mlp"].astype(f32), precision=hi)
             + params["bp"])
    return jax.nn.sigmoid(logit).reshape(-1)


if __name__ == "__main__":
    num_users, num_items = 100, 200
    embedding_dim = 32
    batch = 8

    key = jax.random.PRNGKey(0)
    kp, ku, ki = jax.random.split(key, 3)
    params = init_params(kp, num_users, num_items, embedding_dim)

    user_indices = jax.random.randint(ku, (batch,), 0, num_users, dtype=jnp.int32)
    item_indices = jax.random.randint(ki, (batch,), 0, num_items, dtype=jnp.int32)

    fwd = jax.jit(ncf_forward)
    out = jax.block_until_ready(fwd(params, user_indices, item_indices))
    ref = jax.block_until_ready(ncf_reference(params, user_indices, item_indices))

    assert out.shape == (batch,), out.shape
    assert jnp.allclose(out, ref, atol=2e-4, rtol=2e-3), (out, ref)
    print("KERNEL_OK")
</pallas_src>

<mosaic_0001>
module attributes {stable_mosaic.version = 11 : i64} {
  func.func @ncf_kernel(%arg0: i32, %arg1: memref<32x128xbf16, #tpu.memory_space<vmem>>, %arg2: memref<32x128xbf16, #tpu.memory_space<vmem>>, %arg3: memref<32x128xbf16, #tpu.memory_space<vmem>>, %arg4: memref<32x128xbf16, #tpu.memory_space<vmem>>, %arg5: memref<64x32xbf16, #tpu.memory_space<vmem>>, %arg6: memref<64x32xbf16, #tpu.memory_space<vmem>>, %arg7: memref<64x1xf32, #tpu.memory_space<vmem>>, %arg8: memref<32x64xbf16, #tpu.memory_space<vmem>>, %arg9: memref<32x1xf32, #tpu.memory_space<vmem>>, %arg10: memref<16x32xbf16, #tpu.memory_space<vmem>>, %arg11: memref<16x1xf32, #tpu.memory_space<vmem>>, %arg12: memref<32x1xbf16, #tpu.memory_space<vmem>>, %arg13: memref<16x1xbf16, #tpu.memory_space<vmem>>, %arg14: memref<1x1xf32, #tpu.memory_space<smem>>, %arg15: memref<1x128xf32, #tpu.memory_space<vmem>>) attributes {dimension_semantics = [#tpu.dimension_semantics<parallel>], iteration_bounds = array<i64: 1>, scalar_prefetch = 0 : i64, scratch_operands = 0 : i64, tpu.core_type = #tpu.core_type<tc>, window_params = [{transform_indices = @transform_0, window_bounds = array<i64: 32, 128>}, {transform_indices = @transform_1, window_bounds = array<i64: 32, 128>}, {transform_indices = @transform_2, window_bounds = array<i64: 32, 128>}, {transform_indices = @transform_3, window_bounds = array<i64: 32, 128>}, {pipeline_mode = #tpu.pipeline_mode<synchronous>, transform_indices = @transform_4, window_bounds = array<i64: 64, 32>}, {pipeline_mode = #tpu.pipeline_mode<synchronous>, transform_indices = @transform_5, window_bounds = array<i64: 64, 32>}, {pipeline_mode = #tpu.pipeline_mode<synchronous>, transform_indices = @transform_6, window_bounds = array<i64: 64, 1>}, {pipeline_mode = #tpu.pipeline_mode<synchronous>, transform_indices = @transform_7, window_bounds = array<i64: 32, 64>}, {pipeline_mode = #tpu.pipeline_mode<synchronous>, transform_indices = @transform_8, window_bounds = array<i64: 32, 1>}, {pipeline_mode = #tpu.pipeline_mode<synchronous>, transform_indices = @transform_9, window_bounds = array<i64: 16, 32>}, {pipeline_mode = #tpu.pipeline_mode<synchronous>, transform_indices = @transform_10, window_bounds = array<i64: 16, 1>}, {pipeline_mode = #tpu.pipeline_mode<synchronous>, transform_indices = @transform_11, window_bounds = array<i64: 32, 1>}, {pipeline_mode = #tpu.pipeline_mode<synchronous>, transform_indices = @transform_12, window_bounds = array<i64: 16, 1>}, {transform_indices = @transform_13, window_bounds = array<i64: 1, 1>}, {transform_indices = @transform_14, window_bounds = array<i64: 1, 128>}]} {
    %c0 = arith.constant 0 : index
    %c0_0 = arith.constant 0 : index
    %0 = vector.load %arg1[%c0, %c0_0] : memref<32x128xbf16, #tpu.memory_space<vmem>>, vector<32x128xbf16>
    %1 = arith.extf %0 : vector<32x128xbf16> to vector<32x128xf32>
    %c0_1 = arith.constant 0 : index
    %c0_2 = arith.constant 0 : index
    %2 = vector.load %arg2[%c0_1, %c0_2] : memref<32x128xbf16, #tpu.memory_space<vmem>>, vector<32x128xbf16>
    %3 = arith.extf %2 : vector<32x128xbf16> to vector<32x128xf32>
    %4 = arith.mulf %1, %3 : vector<32x128xf32>
    %c0_3 = arith.constant 0 : index
    %c0_4 = arith.constant 0 : index
    %5 = vector.load %arg5[%c0_3, %c0_4] : memref<64x32xbf16, #tpu.memory_space<vmem>>, vector<64x32xbf16>
    %6 = arith.extf %5 : vector<64x32xbf16> to vector<64x32xf32>
    %c0_5 = arith.constant 0 : index
    %c0_6 = arith.constant 0 : index
    %7 = vector.load %arg3[%c0_5, %c0_6] : memref<32x128xbf16, #tpu.memory_space<vmem>>, vector<32x128xbf16>
    %8 = arith.extf %7 : vector<32x128xbf16> to vector<32x128xf32>
    %cst = arith.constant dense<0.000000e+00> : vector<64x128xf32>
    %9 = tpu.matmul %6, %8, %cst {dimension_numbers = #tpu.dot_dimension_numbers<[1], [0], [0], [1], [0, 0, 1, 1], [], []>} : vector<64x32xf32>, vector<32x128xf32>, vector<64x128xf32> -> vector<64x128xf32>
    %c0_7 = arith.constant 0 : index
    %c0_8 = arith.constant 0 : index
    %10 = vector.load %arg6[%c0_7, %c0_8] : memref<64x32xbf16, #tpu.memory_space<vmem>>, vector<64x32xbf16>
    %11 = arith.extf %10 : vector<64x32xbf16> to vector<64x32xf32>
    %c0_9 = arith.constant 0 : index
    %c0_10 = arith.constant 0 : index
    %12 = vector.load %arg4[%c0_9, %c0_10] : memref<32x128xbf16, #tpu.memory_space<vmem>>, vector<32x128xbf16>
    %13 = arith.extf %12 : vector<32x128xbf16> to vector<32x128xf32>
    %cst_11 = arith.constant dense<0.000000e+00> : vector<64x128xf32>
    %14 = tpu.matmul %11, %13, %cst_11 {dimension_numbers = #tpu.dot_dimension_numbers<[1], [0], [0], [1], [0, 0, 1, 1], [], []>} : vector<64x32xf32>, vector<32x128xf32>, vector<64x128xf32> -> vector<64x128xf32>
    %15 = arith.addf %9, %14 : vector<64x128xf32>
    %c0_12 = arith.constant 0 : index
    %c0_13 = arith.constant 0 : index
    %16 = vector.load %arg7[%c0_12, %c0_13] : memref<64x1xf32, #tpu.memory_space<vmem>>, vector<64x1xf32>
    %17 = vector.broadcast %16 : vector<64x1xf32> to vector<64x128xf32>
    %18 = arith.addf %15, %17 : vector<64x128xf32>
    %cst_14 = arith.constant 0.000000e+00 : f32
    %19 = vector.broadcast %cst_14 : f32 to vector<64x128xf32>
    %20 = arith.maximumf %18, %19 : vector<64x128xf32>
    %c0_15 = arith.constant 0 : index
    %c0_16 = arith.constant 0 : index
    %21 = vector.load %arg8[%c0_15, %c0_16] : memref<32x64xbf16, #tpu.memory_space<vmem>>, vector<32x64xbf16>
    %22 = arith.extf %21 : vector<32x64xbf16> to vector<32x64xf32>
    %cst_17 = arith.constant dense<0.000000e+00> : vector<32x128xf32>
    %23 = tpu.matmul %22, %20, %cst_17 {dimension_numbers = #tpu.dot_dimension_numbers<[1], [0], [0], [1], [0, 0, 1, 1], [], []>} : vector<32x64xf32>, vector<64x128xf32>, vector<32x128xf32> -> vector<32x128xf32>
    %c0_18 = arith.constant 0 : index
    %c0_19 = arith.constant 0 : index
    %24 = vector.load %arg9[%c0_18, %c0_19] : memref<32x1xf32, #tpu.memory_space<vmem>>, vector<32x1xf32>
    %25 = vector.broadcast %24 : vector<32x1xf32> to vector<32x128xf32>
    %26 = arith.addf %23, %25 : vector<32x128xf32>
    %cst_20 = arith.constant 0.000000e+00 : f32
    %27 = vector.broadcast %cst_20 : f32 to vector<32x128xf32>
    %28 = arith.maximumf %26, %27 : vector<32x128xf32>
    %c0_21 = arith.constant 0 : index
    %c0_22 = arith.constant 0 : index
    %29 = vector.load %arg10[%c0_21, %c0_22] : memref<16x32xbf16, #tpu.memory_space<vmem>>, vector<16x32xbf16>
    %30 = arith.extf %29 : vector<16x32xbf16> to vector<16x32xf32>
    %cst_23 = arith.constant dense<0.000000e+00> : vector<16x128xf32>
    %31 = tpu.matmul %30, %28, %cst_23 {dimension_numbers = #tpu.dot_dimension_numbers<[1], [0], [0], [1], [0, 0, 1, 1], [], []>} : vector<16x32xf32>, vector<32x128xf32>, vector<16x128xf32> -> vector<16x128xf32>
    %c0_24 = arith.constant 0 : index
    %c0_25 = arith.constant 0 : index
    %32 = vector.load %arg11[%c0_24, %c0_25] : memref<16x1xf32, #tpu.memory_space<vmem>>, vector<16x1xf32>
    %33 = vector.broadcast %32 : vector<16x1xf32> to vector<16x128xf32>
    %34 = arith.addf %31, %33 : vector<16x128xf32>
    %cst_26 = arith.constant 0.000000e+00 : f32
    %35 = vector.broadcast %cst_26 : f32 to vector<16x128xf32>
    %36 = arith.maximumf %34, %35 : vector<16x128xf32>
    %c0_27 = arith.constant 0 : index
    %c0_28 = arith.constant 0 : index
    %37 = vector.load %arg12[%c0_27, %c0_28] : memref<32x1xbf16, #tpu.memory_space<vmem>>, vector<32x1xbf16>
    %38 = arith.extf %37 : vector<32x1xbf16> to vector<32x1xf32>
    %39 = vector.broadcast %38 : vector<32x1xf32> to vector<32x128xf32>
    %40 = arith.mulf %4, %39 : vector<32x128xf32>
    %cst_29 = arith.constant dense<0.000000e+00> : vector<128xf32>
    %41 = vector.multi_reduction <add>, %40, %cst_29 [0] : vector<32x128xf32> to vector<128xf32>
    %42 = vector.shape_cast %41 : vector<128xf32> to vector<1x128xf32>
    %c0_30 = arith.constant 0 : index
    %c0_31 = arith.constant 0 : index
    %43 = vector.load %arg13[%c0_30, %c0_31] : memref<16x1xbf16, #tpu.memory_space<vmem>>, vector<16x1xbf16>
    %44 = arith.extf %43 : vector<16x1xbf16> to vector<16x1xf32>
    %45 = vector.broadcast %44 : vector<16x1xf32> to vector<16x128xf32>
    %46 = arith.mulf %36, %45 : vector<16x128xf32>
    %cst_32 = arith.constant dense<0.000000e+00> : vector<128xf32>
    %47 = vector.multi_reduction <add>, %46, %cst_32 [0] : vector<16x128xf32> to vector<128xf32>
    %48 = vector.shape_cast %47 : vector<128xf32> to vector<1x128xf32>
    %49 = arith.addf %42, %48 : vector<1x128xf32>
    %c0_33 = arith.constant 0 : index
    %c0_34 = arith.constant 0 : index
    %50 = memref.load %arg14[%c0_33, %c0_34] : memref<1x1xf32, #tpu.memory_space<smem>>
    %51 = vector.broadcast %50 : f32 to vector<1x128xf32>
    %52 = arith.addf %49, %51 : vector<1x128xf32>
    %53 = arith.negf %52 : vector<1x128xf32>
    %54 = math.exp %53 : vector<1x128xf32>
    %cst_35 = arith.constant 1.000000e+00 : f32
    %55 = vector.broadcast %cst_35 : f32 to vector<1x128xf32>
    %56 = arith.addf %55, %54 : vector<1x128xf32>
    %57 = arith.divf %55, %56 : vector<1x128xf32>
    %c0_36 = arith.constant 0 : index
    %c0_37 = arith.constant 0 : index
    %58 = vector.load %arg15[%c0_36, %c0_37] : memref<1x128xf32, #tpu.memory_space<vmem>>, vector<1x128xf32>
    tpu.vector_store %arg15[%c0_36, %c0_37], %57 {strides = array<i32>} : memref<1x128xf32, #tpu.memory_space<vmem>>, vector<1x128xf32>,
    return
  }
  func.func @transform_0(%arg0: i32) -> (i32, i32) {
    %c0_i32 = arith.constant 0 : i32
    %c0_i32_0 = arith.constant 0 : i32
    return %c0_i32, %arg0 : i32, i32
  }
  func.func @transform_1(%arg0: i32) -> (i32, i32) {
    %c0_i32 = arith.constant 0 : i32
    %c0_i32_0 = arith.constant 0 : i32
    return %c0_i32, %arg0 : i32, i32
  }
  func.func @transform_2(%arg0: i32) -> (i32, i32) {
    %c0_i32 = arith.constant 0 : i32
    %c0_i32_0 = arith.constant 0 : i32
    return %c0_i32, %arg0 : i32, i32
  }
  func.func @transform_3(%arg0: i32) -> (i32, i32) {
    %c0_i32 = arith.constant 0 : i32
    %c0_i32_0 = arith.constant 0 : i32
    return %c0_i32, %arg0 : i32, i32
  }
  func.func @transform_4(%arg0: i32) -> (i32, i32) {
    %c0_i32 = arith.constant 0 : i32
    %c0_i32_0 = arith.constant 0 : i32
    %c0_i32_1 = arith.constant 0 : i32
    return %c0_i32, %c0_i32_0 : i32, i32
  }
  func.func @transform_5(%arg0: i32) -> (i32, i32) {
    %c0_i32 = arith.constant 0 : i32
    %c0_i32_0 = arith.constant 0 : i32
    %c0_i32_1 = arith.constant 0 : i32
    return %c0_i32, %c0_i32_0 : i32, i32
  }
  func.func @transform_6(%arg0: i32) -> (i32, i32) {
    %c0_i32 = arith.constant 0 : i32
    %c0_i32_0 = arith.constant 0 : i32
    %c0_i32_1 = arith.constant 0 : i32
    return %c0_i32, %c0_i32_0 : i32, i32
  }
  func.func @transform_7(%arg0: i32) -> (i32, i32) {
    %c0_i32 = arith.constant 0 : i32
    %c0_i32_0 = arith.constant 0 : i32
    %c0_i32_1 = arith.constant 0 : i32
    return %c0_i32, %c0_i32_0 : i32, i32
  }
  func.func @transform_8(%arg0: i32) -> (i32, i32) {
    %c0_i32 = arith.constant 0 : i32
    %c0_i32_0 = arith.constant 0 : i32
    %c0_i32_1 = arith.constant 0 : i32
    return %c0_i32, %c0_i32_0 : i32, i32
  }
  func.func @transform_9(%arg0: i32) -> (i32, i32) {
    %c0_i32 = arith.constant 0 : i32
    %c0_i32_0 = arith.constant 0 : i32
    %c0_i32_1 = arith.constant 0 : i32
    return %c0_i32, %c0_i32_0 : i32, i32
  }
  func.func @transform_10(%arg0: i32) -> (i32, i32) {
    %c0_i32 = arith.constant 0 : i32
    %c0_i32_0 = arith.constant 0 : i32
    %c0_i32_1 = arith.constant 0 : i32
    return %c0_i32, %c0_i32_0 : i32, i32
  }
  func.func @transform_11(%arg0: i32) -> (i32, i32) {
    %c0_i32 = arith.constant 0 : i32
    %c0_i32_0 = arith.constant 0 : i32
    %c0_i32_1 = arith.constant 0 : i32
    return %c0_i32, %c0_i32_0 : i32, i32
  }
  func.func @transform_12(%arg0: i32) -> (i32, i32) {
    %c0_i32 = arith.constant 0 : i32
    %c0_i32_0 = arith.constant 0 : i32
    %c0_i32_1 = arith.constant 0 : i32
    return %c0_i32, %c0_i32_0 : i32, i32
  }
  func.func @transform_13(%arg0: i32) -> (i32, i32) {
    %c0_i32 = arith.constant 0 : i32
    %c0_i32_0 = arith.constant 0 : i32
    %c0_i32_1 = arith.constant 0 : i32
    return %c0_i32, %c0_i32_0 : i32, i32
  }
  func.func @transform_14(%arg0: i32) -> (i32, i32) {
    %c0_i32 = arith.constant 0 : i32
    %c0_i32_0 = arith.constant 0 : i32
    return %c0_i32, %arg0 : i32, i32
  }
}

</mosaic_0001>

<llo_original>
// kernel: ncf_forward.1
$region0: #{ncf_forward.1}
  #allocation0 [shape = 'u32[]', space=smem, size = 0x4, offset = 0x4, fixed_abs, tag = 'smem constant byte address 0x4 - core index']
  #allocation1 [shape = 'u32[144,128]{1,0:T(1,128)}', space=vmem, size = 0x12000, scoped, tag = 'internal scratch']
  #allocation2 [shape = 'f32[1,1]{1,0:T(1,128)S(6)}', space=smem, size = 0x200, scoped, tag = 'scoped memory for ncf_forward.1']
  %s0 = inlined_call_operand.vmem [shape: bf16[32,128], index: 0, kind: input, shape index: {}]
  %s1 = inlined_call_operand.vmem [shape: bf16[32,128], index: 1, kind: input, shape index: {}]
  %s2 = inlined_call_operand.vmem [shape: bf16[32,128], index: 2, kind: input, shape index: {}]
  %s3 = inlined_call_operand.vmem [shape: bf16[32,128], index: 3, kind: input, shape index: {}]
  %s4 = inlined_call_operand.vmem [shape: bf16[64,32], index: 4, kind: input, shape index: {}]
  %s5 = inlined_call_operand.vmem [shape: bf16[64,32], index: 5, kind: input, shape index: {}]
  %s6 = inlined_call_operand.vmem [shape: f32[64,1], index: 6, kind: input, shape index: {}]
  %s7 = inlined_call_operand.vmem [shape: bf16[32,64], index: 7, kind: input, shape index: {}]
  %s8 = inlined_call_operand.vmem [shape: f32[32,1], index: 8, kind: input, shape index: {}]
  %s9 = inlined_call_operand.vmem [shape: bf16[16,32], index: 9, kind: input, shape index: {}]
  %s10 = inlined_call_operand.vmem [shape: f32[16,1], index: 10, kind: input, shape index: {}]
  %s11 = inlined_call_operand.vmem [shape: bf16[32,1], index: 11, kind: input, shape index: {}]
  %s12 = inlined_call_operand.vmem [shape: bf16[16,1], index: 12, kind: input, shape index: {}]
  %s13 = inlined_call_operand.<no memory space> [shape: f32[1,1], index: 13, kind: input, shape index: {}]
  %s14 = inlined_call_operand.vmem [shape: f32[1,128], index: 14, kind: output, shape index: {}]
  %s15 = sld [smem:[#allocation0]]
  $region66: #{ncf_forward.1} parent=0
    _
  %s17 = ssub.s32 1, %s15
  %s18 = scalar_select 0, %s17, %s15
  %19 = sst [smem:[#allocation2]] %s13
  // Predicated region
  $region2: #{ncf_forward.1} parent=0 // pred_check
    _
  $region3: #{ncf_forward.1} parent=0 // pred_check_branch
    %21 = sbr.rel (0) target = $region5
  $region4: #{ncf_forward.1} parent=0 // pred_region
    _
  $region5: #{ncf_forward.1} parent=0 // pred_fallthru
    _
  // Predicated region
  $region6: #{ncf_forward.1} parent=0 // pred_check
    _
  $region7: #{ncf_forward.1} parent=0 // pred_check_branch
    %23 = sbr.rel (0) target = $region9
  $region8: #{ncf_forward.1} parent=0 // pred_region
    _
  $region9: #{ncf_forward.1} parent=0 // pred_fallthru
    _
  // Predicated region
  $region10: #{ncf_forward.1} parent=0 // pred_check
    _
  $region11: #{ncf_forward.1} parent=0 // pred_check_branch
    %25 = sbr.rel (0) target = $region13
  $region12: #{ncf_forward.1} parent=0 // pred_region
    _
  $region13: #{ncf_forward.1} parent=0 // pred_fallthru
    _
  // Predicated region
  $region14: #{ncf_forward.1} parent=0 // pred_check
    _
  $region15: #{ncf_forward.1} parent=0 // pred_check_branch
    %27 = sbr.rel (0) target = $region17
  $region16: #{ncf_forward.1} parent=0 // pred_region
    _
  $region17: #{ncf_forward.1} parent=0 // pred_fallthru
    _
  // Predicated region
  $region18: #{ncf_forward.1} parent=0 // pred_check
    _
  $region19: #{ncf_forward.1} parent=0 // pred_check_branch
    %29 = sbr.rel (0) target = $region21
  $region20: #{ncf_forward.1} parent=0 // pred_region
    _
  $region21: #{ncf_forward.1} parent=0 // pred_fallthru
    _
  // Predicated region
  $region22: #{ncf_forward.1} parent=0 // pred_check
    _
  $region23: #{ncf_forward.1} parent=0 // pred_check_branch
    %31 = sbr.rel (0) target = $region25
  $region24: #{ncf_forward.1} parent=0 // pred_region
    _
  $region25: #{ncf_forward.1} parent=0 // pred_fallthru
    _
  // Predicated region
  $region26: #{ncf_forward.1} parent=0 // pred_check
    _
  $region27: #{ncf_forward.1} parent=0 // pred_check_branch
    %33 = sbr.rel (0) target = $region29
  $region28: #{ncf_forward.1} parent=0 // pred_region
    _
  $region29: #{ncf_forward.1} parent=0 // pred_fallthru
    _
  // Predicated region
  $region30: #{ncf_forward.1} parent=0 // pred_check
    _
  $region31: #{ncf_forward.1} parent=0 // pred_check_branch
    %35 = sbr.rel (0) target = $region33
  $region32: #{ncf_forward.1} parent=0 // pred_region
    _
  $region33: #{ncf_forward.1} parent=0 // pred_fallthru
    _
  // Predicated region
  $region34: #{ncf_forward.1} parent=0 // pred_check
    _
  $region35: #{ncf_forward.1} parent=0 // pred_check_branch
    %37 = sbr.rel (0) target = $region37
  $region36: #{ncf_forward.1} parent=0 // pred_region
    _
  $region37: #{ncf_forward.1} parent=0 // pred_fallthru
    _
  // Predicated region
  $region38: #{ncf_forward.1} parent=0 // pred_check
    _
  $region39: #{ncf_forward.1} parent=0 // pred_check_branch
    %39 = sbr.rel (0) target = $region41
  $region40: #{ncf_forward.1} parent=0 // pred_region
    _
  $region41: #{ncf_forward.1} parent=0 // pred_fallthru
    _
  // Predicated region
  $region42: #{ncf_forward.1} parent=0 // pred_check
    _
  $region43: #{ncf_forward.1} parent=0 // pred_check_branch
    %41 = sbr.rel (0) target = $region45
  $region44: #{ncf_forward.1} parent=0 // pred_region
    _
  $region45: #{ncf_forward.1} parent=0 // pred_fallthru
    _
  // Predicated region
  $region46: #{ncf_forward.1} parent=0 // pred_check
    _
  $region47: #{ncf_forward.1} parent=0 // pred_check_branch
    %43 = sbr.rel (0) target = $region49
  $region48: #{ncf_forward.1} parent=0 // pred_region
    _
  $region49: #{ncf_forward.1} parent=0 // pred_fallthru
    _
  // Predicated region
  $region50: #{ncf_forward.1} parent=0 // pred_check
    _
  $region51: #{ncf_forward.1} parent=0 // pred_check_branch
    %45 = sbr.rel (0) target = $region53
  $region52: #{ncf_forward.1} parent=0 // pred_region
    _
  $region53: #{ncf_forward.1} parent=0 // pred_fallthru
    _
  // Predicated region
  $region54: #{ncf_forward.1} parent=0 // pred_check
    _
  $region55: #{ncf_forward.1} parent=0 // pred_check_branch
    %47 = sbr.rel (0) target = $region57
  $region56: #{ncf_forward.1} parent=0 // pred_region
    _
  $region57: #{ncf_forward.1} parent=0 // pred_fallthru
    _
  %v48 = vld [vmem:[%s0] sm:$0xf]
  %v49 = vld [vmem:[%s0 + $0x4] sm:$0xf]
  %v50 = vld [vmem:[%s0 + $0x8] sm:$0xf]
  %v51 = vld [vmem:[%s0 + $0xc] sm:$0xf]
  %v52 = vunpack.c.l.bf16 %v48
  %v53 = vunpack.c.l.bf16 %v49
  %v54 = vunpack.c.l.bf16 %v50
  %v55 = vunpack.c.l.bf16 %v51
  %v56 = vld [vmem:[%s1] sm:$0xf]
  %v57 = vld [vmem:[%s1 + $0x4] sm:$0xf]
  %v58 = vld [vmem:[%s1 + $0x8] sm:$0xf]
  %v59 = vld [vmem:[%s1 + $0xc] sm:$0xf]
  %v60 = vunpack.c.l.bf16 %v56
  %v61 = vunpack.c.l.bf16 %v57
  %v62 = vunpack.c.l.bf16 %v58
  %v63 = vunpack.c.l.bf16 %v59
  %v64 = vmul.f32 %v52, %v60
  %v65 = vmul.f32 %v53, %v61
  %v66 = vmul.f32 %v54, %v62
  %v67 = vmul.f32 %v55, %v63
  %v68 = vld [vmem:[%s4] sm:$0xf]
  %v69 = vld [vmem:[%s4 + $0x4] sm:$0xf]
  %v70 = vld [vmem:[%s4 + $0x8] sm:$0xf]
  %v71 = vld [vmem:[%s4 + $0xc] sm:$0xf]
  %v72 = vld [vmem:[%s4 + $0x10] sm:$0xf]
  %v73 = vld [vmem:[%s4 + $0x14] sm:$0xf]
  %v74 = vld [vmem:[%s4 + $0x18] sm:$0xf]
  %v75 = vld [vmem:[%s4 + $0x1c] sm:$0xf]
  %v76 = vunpack.c.l.bf16 %v68
  %v77 = vunpack.c.l.bf16 %v69
  %v78 = vunpack.c.l.bf16 %v70
  %v79 = vunpack.c.l.bf16 %v71
  %v80 = vunpack.c.l.bf16 %v72
  %v81 = vunpack.c.l.bf16 %v73
  %v82 = vunpack.c.l.bf16 %v74
  %v83 = vunpack.c.l.bf16 %v75
  %v84 = vld [vmem:[%s2] sm:$0xf]
  %v85 = vld [vmem:[%s2 + $0x4] sm:$0xf]
  %v86 = vld [vmem:[%s2 + $0x8] sm:$0xf]
  %v87 = vld [vmem:[%s2 + $0xc] sm:$0xf]
  %v88 = vunpack.c.l.bf16 %v84
  %v89 = vunpack.c.l.bf16 %v85
  %v90 = vunpack.c.l.bf16 %v86
  %v91 = vunpack.c.l.bf16 %v87
  %v92 = vld [vmem:[%s5] sm:$0xf]
  %v93 = vld [vmem:[%s5 + $0x4] sm:$0xf]
  %v94 = vld [vmem:[%s5 + $0x8] sm:$0xf]
  %v95 = vld [vmem:[%s5 + $0xc] sm:$0xf]
  %v96 = vld [vmem:[%s5 + $0x10] sm:$0xf]
  %v97 = vld [vmem:[%s5 + $0x14] sm:$0xf]
  %v98 = vld [vmem:[%s5 + $0x18] sm:$0xf]
  %v99 = vld [vmem:[%s5 + $0x1c] sm:$0xf]
  %v100 = vunpack.c.l.bf16 %v92
  %v101 = vunpack.c.l.bf16 %v93
  %v102 = vunpack.c.l.bf16 %v94
  %v103 = vunpack.c.l.bf16 %v95
  %v104 = vunpack.c.l.bf16 %v96
  %v105 = vunpack.c.l.bf16 %v97
  %v106 = vunpack.c.l.bf16 %v98
  %v107 = vunpack.c.l.bf16 %v99
  %v108 = vld [vmem:[%s3] sm:$0xf]
  %v109 = vld [vmem:[%s3 + $0x4] sm:$0xf]
  %v110 = vld [vmem:[%s3 + $0x8] sm:$0xf]
  %v111 = vld [vmem:[%s3 + $0xc] sm:$0xf]
  %v112 = vunpack.c.l.bf16 %v108
  %v113 = vunpack.c.l.bf16 %v109
  %v114 = vunpack.c.l.bf16 %v110
  %v115 = vunpack.c.l.bf16 %v111
  %vm116 = vcmask 261120
  %v118 = vsel %vm116, %v100, 0
  %v121 = vsel %vm116, %v101, 0
  %v124 = vsel %vm116, %v102, 0
  %v127 = vsel %vm116, %v103, 0
  %v130 = vsel %vm116, %v104, 0
  %v133 = vsel %vm116, %v105, 0
  %v136 = vsel %vm116, %v106, 0
  %v139 = vsel %vm116, %v107, 0
  %141 = vmatprep.subr.mxu0 0.0
  %142 = vmatpush1.msra.mxu0 %v112
  %143 = vmatprep.subr.mxu0 0.0
  %144 = vmatpush1.msra.mxu0 %v113
  %145 = vmatprep.subr.mxu0 0.0
  %146 = vmatpush1.msra.mxu0 %v114
  %147 = vmatprep.subr.mxu0 0.0
  %148 = vmatpush1.msra.mxu0 %v115
  %149 = vmatprep.subr.mxu0 0.0
  %150 = vmatpush1.msra.mxu0 0.0
  %151 = vmatprep.subr.mxu0 0.0
  %152 = vmatpush1.msra.mxu0 0.0
  %153 = vmatprep.subr.mxu0 0.0
  %154 = vmatpush1.msra.mxu0 0.0
  %155 = vmatprep.subr.mxu0 0.0
  %156 = vmatpush1.msra.mxu0 0.0
  %157 = vmatprep.subr.mxu0 0.0
  %158 = vmatpush1.msra.mxu0 0.0
  %159 = vmatprep.subr.mxu0 0.0
  %160 = vmatpush1.msra.mxu0 0.0
  %161 = vmatprep.subr.mxu0 0.0
  %162 = vmatpush1.msra.mxu0 0.0
  %163 = vmatprep.subr.mxu0 0.0
  %164 = vmatpush1.msra.mxu0 0.0
  %165 = vmatprep.subr.mxu0 0.0
  %166 = vmatpush1.msra.mxu0 0.0
  %167 = vmatprep.subr.mxu0 0.0
  %168 = vmatpush1.msra.mxu0 0.0
  %169 = vmatprep.subr.mxu0 0.0
  %170 = vmatpush1.msra.mxu0 0.0
  %171 = vmatprep.subr.mxu0 0.0
  %172 = vmatpush1.msra.mxu0 0.0
  %173 = vmatprep.subr.mxu0 0.0
  %174 = vmatpush1.msra.mxu0 0.0
  %175 = vmatprep.subr.mxu0 0.0
  %176 = vmatpush1.msra.mxu0 0.0
  %177 = vmatprep.subr.mxu0 0.0
  %178 = vmatpush1.msra.mxu0 0.0
  %179 = vmatprep.subr.mxu0 0.0
  %180 = vmatpush1.msra.mxu0 0.0
  %181 = vmatprep.subr.mxu0 0.0
  %182 = vmatpush1.msra.mxu0 0.0
  %183 = vmatprep.subr.mxu0 0.0
  %184 = vmatpush1.msra.mxu0 0.0
  %185 = vmatprep.subr.mxu0 0.0
  %186 = vmatpush1.msra.mxu0 0.0
  %187 = vmatprep.subr.mxu0 0.0
  %188 = vmatpush1.msra.mxu0 0.0
  %189 = vmatprep.subr.mxu0 0.0
  %190 = vmatpush1.msra.mxu0 0.0
  %191 = vmatprep.subr.mxu0 0.0
  %192 = vmatpush1.msra.mxu0 0.0
  %193 = vmatprep.subr.mxu0 0.0
  %194 = vmatpush1.msra.mxu0 0.0
  %195 = vmatprep.subr.mxu0 0.0
  %196 = vmatpush1.msra.mxu0 0.0
  %197 = vmatprep.subr.mxu0 0.0
  %198 = vmatpush1.msra.mxu0 0.0
  %199 = vmatprep.subr.mxu0 0.0
  %200 = vmatpush1.msra.mxu0 0.0
  %201 = vmatprep.subr.mxu0 0.0
  %202 = vmatpush1.msra.mxu0 0.0
  %203 = vmatprep.subr.mxu0 0.0
  %204 = vmatpush1.msra.mxu0 0.0
  %205 = vmatprep.mubr.f32.mxu0 0.0
  %206 = vmatmul.mubr.f32.gmra.mrb[0].mxu0 %v118
  %v207 = vpop.f32.mrb[0].mxu0
  %v208 = vadd.f32 0.0, %v207
  %v209 = vpop.f32.mrb[0].mxu0
  %210 = vmatprep.mubr.f32.mxu0 0.0
  %211 = vmatmul.mubr.f32.gmra.mrb[0].mxu0 %v121
  %v212 = vpop.f32.mrb[0].mxu0
  %v213 = vadd.f32 0.0, %v212
  %v214 = vpop.f32.mrb[0].mxu0
  %215 = vmatprep.mubr.f32.mxu0 0.0
  %216 = vmatmul.mubr.f32.gmra.mrb[0].mxu0 %v124
  %v217 = vpop.f32.mrb[0].mxu0
  %v218 = vadd.f32 0.0, %v217
  %v219 = vpop.f32.mrb[0].mxu0
  %220 = vmatprep.mubr.f32.mxu0 0.0
  %221 = vmatmul.mubr.f32.gmra.mrb[0].mxu0 %v127
  %v222 = vpop.f32.mrb[0].mxu0
  %v223 = vadd.f32 0.0, %v222
  %v224 = vpop.f32.mrb[0].mxu0
  %225 = vmatprep.mubr.f32.mxu0 0.0
  %226 = vmatmul.mubr.f32.gmra.mrb[0].mxu0 %v130
  %v227 = vpop.f32.mrb[0].mxu0
  %v228 = vadd.f32 0.0, %v227
  %v229 = vpop.f32.mrb[0].mxu0
  %230 = vmatprep.mubr.f32.mxu0 0.0
  %231 = vmatmul.mubr.f32.gmra.mrb[0].mxu0 %v133
  %v232 = vpop.f32.mrb[0].mxu0
  %v233 = vadd.f32 0.0, %v232
  %v234 = vpop.f32.mrb[0].mxu0
  %235 = vmatprep.mubr.f32.mxu0 0.0
  %236 = vmatmul.mubr.f32.gmra.mrb[0].mxu0 %v136
  %v237 = vpop.f32.mrb[0].mxu0
  %v238 = vadd.f32 0.0, %v237
  %v239 = vpop.f32.mrb[0].mxu0
  %240 = vmatprep.mubr.f32.mxu0 0.0
  %241 = vmatmul.mubr.f32.gmra.mrb[0].mxu0 %v139
  %v242 = vpop.f32.mrb[0].mxu0
  %v243 = vadd.f32 0.0, %v242
  %v244 = vpop.f32.mrb[0].mxu0
  %245 = vdwg.mxu0
  %v247 = vsel %vm116, %v76, 0
  %v250 = vsel %vm116, %v77, 0
  %v253 = vsel %vm116, %v78, 0
  %v256 = vsel %vm116, %v79, 0
  %v259 = vsel %vm116, %v80, 0
  %v262 = vsel %vm116, %v81, 0
  %v265 = vsel %vm116, %v82, 0
  %v268 = vsel %vm116, %v83, 0
  %270 = vmatprep.subr.mxu0 0.0
  %271 = vmatpush1.msra.mxu0 %v88
  %272 = vmatprep.subr.mxu0 0.0
  %273 = vmatpush1.msra.mxu0 %v89
  %274 = vmatprep.subr.mxu0 0.0
  %275 = vmatpush1.msra.mxu0 %v90
  %276 = vmatprep.subr.mxu0 0.0
  %277 = vmatpush1.msra.mxu0 %v91
  %278 = vmatprep.subr.mxu0 0.0
  %279 = vmatpush1.msra.mxu0 0.0
  %280 = vmatprep.subr.mxu0 0.0
  %281 = vmatpush1.msra.mxu0 0.0
  %282 = vmatprep.subr.mxu0 0.0
  %283 = vmatpush1.msra.mxu0 0.0
  %284 = vmatprep.subr.mxu0 0.0
  %285 = vmatpush1.msra.mxu0 0.0
  %286 = vmatprep.subr.mxu0 0.0
  %287 = vmatpush1.msra.mxu0 0.0
  %288 = vmatprep.subr.mxu0 0.0
  %289 = vmatpush1.msra.mxu0 0.0
  %290 = vmatprep.subr.mxu0 0.0
  %291 = vmatpush1.msra.mxu0 0.0
  %292 = vmatprep.subr.mxu0 0.0
  %293 = vmatpush1.msra.mxu0 0.0
  %294 = vmatprep.subr.mxu0 0.0
  %295 = vmatpush1.msra.mxu0 0.0
  %296 = vmatprep.subr.mxu0 0.0
  %297 = vmatpush1.msra.mxu0 0.0
  %298 = vmatprep.subr.mxu0 0.0
  %299 = vmatpush1.msra.mxu0 0.0
  %300 = vmatprep.subr.mxu0 0.0
  %301 = vmatpush1.msra.mxu0 0.0
  %302 = vmatprep.subr.mxu0 0.0
  %303 = vmatpush1.msra.mxu0 0.0
  %304 = vmatprep.subr.mxu0 0.0
  %305 = vmatpush1.msra.mxu0 0.0
  %306 = vmatprep.subr.mxu0 0.0
  %307 = vmatpush1.msra.mxu0 0.0
  %308 = vmatprep.subr.mxu0 0.0
  %309 = vmatpush1.msra.mxu0 0.0
  %310 = vmatprep.subr.mxu0 0.0
  %311 = vmatpush1.msra.mxu0 0.0
  %312 = vmatprep.subr.mxu0 0.0
  %313 = vmatpush1.msra.mxu0 0.0
  %314 = vmatprep.subr.mxu0 0.0
  %315 = vmatpush1.msra.mxu0 0.0
  %316 = vmatprep.subr.mxu0 0.0
  %317 = vmatpush1.msra.mxu0 0.0
  %318 = vmatprep.subr.mxu0 0.0
  %319 = vmatpush1.msra.mxu0 0.0
  %320 = vmatprep.subr.mxu0 0.0
  %321 = vmatpush1.msra.mxu0 0.0
  %322 = vmatprep.subr.mxu0 0.0
  %323 = vmatpush1.msra.mxu0 0.0
  %324 = vmatprep.subr.mxu0 0.0
  %325 = vmatpush1.msra.mxu0 0.0
  %326 = vmatprep.subr.mxu0 0.0
  %327 = vmatpush1.msra.mxu0 0.0
  %328 = vmatprep.subr.mxu0 0.0
  %329 = vmatpush1.msra.mxu0 0.0
  %330 = vmatprep.subr.mxu0 0.0
  %331 = vmatpush1.msra.mxu0 0.0
  %332 = vmatprep.subr.mxu0 0.0
  %333 = vmatpush1.msra.mxu0 0.0
  %334 = vmatprep.mubr.f32.mxu0 0.0
  %335 = vmatmul.mubr.f32.gmra.mrb[0].mxu0 %v247
  %v336 = vpop.f32.mrb[0].mxu0
  %v337 = vadd.f32 %v208, %v336
  %v338 = vpop.f32.mrb[0].mxu0
  %339 = vmatprep.mubr.f32.mxu0 0.0
  %340 = vmatmul.mubr.f32.gmra.mrb[0].mxu0 %v250
  %v341 = vpop.f32.mrb[0].mxu0
  %v342 = vadd.f32 %v213, %v341
  %v343 = vpop.f32.mrb[0].mxu0
  %344 = vmatprep.mubr.f32.mxu0 0.0
  %345 = vmatmul.mubr.f32.gmra.mrb[0].mxu0 %v253
  %v346 = vpop.f32.mrb[0].mxu0
  %v347 = vadd.f32 %v218, %v346
  %v348 = vpop.f32.mrb[0].mxu0
  %349 = vmatprep.mubr.f32.mxu0 0.0
  %350 = vmatmul.mubr.f32.gmra.mrb[0].mxu0 %v256
  %v351 = vpop.f32.mrb[0].mxu0
  %v352 = vadd.f32 %v223, %v351
  %v353 = vpop.f32.mrb[0].mxu0
  %354 = vmatprep.mubr.f32.mxu0 0.0
  %355 = vmatmul.mubr.f32.gmra.mrb[0].mxu0 %v259
  %v356 = vpop.f32.mrb[0].mxu0
  %v357 = vadd.f32 %v228, %v356
  %v358 = vpop.f32.mrb[0].mxu0
  %359 = vmatprep.mubr.f32.mxu0 0.0
  %360 = vmatmul.mubr.f32.gmra.mrb[0].mxu0 %v262
  %v361 = vpop.f32.mrb[0].mxu0
  %v362 = vadd.f32 %v233, %v361
  %v363 = vpop.f32.mrb[0].mxu0
  %364 = vmatprep.mubr.f32.mxu0 0.0
  %365 = vmatmul.mubr.f32.gmra.mrb[0].mxu0 %v265
  %v366 = vpop.f32.mrb[0].mxu0
  %v367 = vadd.f32 %v238, %v366
  %v368 = vpop.f32.mrb[0].mxu0
  %369 = vmatprep.mubr.f32.mxu0 0.0
  %370 = vmatmul.mubr.f32.gmra.mrb[0].mxu0 %v268
  %v371 = vpop.f32.mrb[0].mxu0
  %v372 = vadd.f32 %v243, %v371
  %v373 = vpop.f32.mrb[0].mxu0
  %374 = vdwg.mxu0
  %v375 = vld [vmem:[%s6] sm:$0xff]
  %v376 = vld [vmem:[%s6 + $0x8] sm:$0xff]
  %v377 = vld [vmem:[%s6 + $0x10] sm:$0xff]
  %v378 = vld [vmem:[%s6 + $0x18] sm:$0xff]
  %v379 = vld [vmem:[%s6 + $0x20] sm:$0xff]
  %v380 = vld [vmem:[%s6 + $0x28] sm:$0xff]
  %v381 = vld [vmem:[%s6 + $0x30] sm:$0xff]
  %v382 = vld [vmem:[%s6 + $0x38] sm:$0xff]
  %384 = vset.pattern.permute.xlu0 0
  %385 = vperm.xlu0 %384, %v375
  %v386 = vpop.permute.xlu0 %385
  %389 = vset.pattern.permute.xlu0 0
  %390 = vperm.xlu0 %389, %v376
  %v391 = vpop.permute.xlu0 %390
  %394 = vset.pattern.permute.xlu0 0
  %395 = vperm.xlu0 %394, %v377
  %v396 = vpop.permute.xlu0 %395
  %399 = vset.pattern.permute.xlu0 0
  %400 = vperm.xlu0 %399, %v378
  %v401 = vpop.permute.xlu0 %400
  %404 = vset.pattern.permute.xlu0 0
  %405 = vperm.xlu0 %404, %v379
  %v406 = vpop.permute.xlu0 %405
  %409 = vset.pattern.permute.xlu0 0
  %410 = vperm.xlu0 %409, %v380
  %v411 = vpop.permute.xlu0 %410
  %414 = vset.pattern.permute.xlu0 0
  %415 = vperm.xlu0 %414, %v381
  %v416 = vpop.permute.xlu0 %415
  %419 = vset.pattern.permute.xlu0 0
  %420 = vperm.xlu0 %419, %v382
  %v421 = vpop.permute.xlu0 %420
  %v423 = vadd.f32 %v337, %v386
  %v424 = vadd.f32 %v342, %v391
  %v425 = vadd.f32 %v347, %v396
  %v426 = vadd.f32 %v352, %v401
  %v427 = vadd.f32 %v357, %v406
  %v428 = vadd.f32 %v362, %v411
  %v429 = vadd.f32 %v367, %v416
  %v430 = vadd.f32 %v372, %v421
  %v431 = vmax.f32 %v423, 0.0
  %v432 = vmax.f32 %v424, 0.0
  %v433 = vmax.f32 %v425, 0.0
  %v434 = vmax.f32 %v426, 0.0
  %v435 = vmax.f32 %v427, 0.0
  %v436 = vmax.f32 %v428, 0.0
  %v437 = vmax.f32 %v429, 0.0
  %v438 = vmax.f32 %v430, 0.0
  %v439 = vld [vmem:[%s7] sm:$0xf]
  %v440 = vld [vmem:[%s7 + $0x4] sm:$0xf]
  %v441 = vld [vmem:[%s7 + $0x8] sm:$0xf]
  %v442 = vld [vmem:[%s7 + $0xc] sm:$0xf]
  %v443 = vunpack.c.l.bf16 %v439
  %v444 = vunpack.c.l.bf16 %v440
  %v445 = vunpack.c.l.bf16 %v441
  %v446 = vunpack.c.l.bf16 %v442
  %v447 = vld [vmem:[%s8] sm:$0xff]
  %v448 = vld [vmem:[%s8 + $0x8] sm:$0xff]
  %v449 = vld [vmem:[%s8 + $0x10] sm:$0xff]
  %v450 = vld [vmem:[%s8 + $0x18] sm:$0xff]
  %452 = vset.pattern.permute.xlu0 0
  %453 = vperm.xlu0 %452, %v447
  %v454 = vpop.permute.xlu0 %453
  %457 = vset.pattern.permute.xlu0 0
  %458 = vperm.xlu0 %457, %v448
  %v459 = vpop.permute.xlu0 %458
  %462 = vset.pattern.permute.xlu0 0
  %463 = vperm.xlu0 %462, %v449
  %v464 = vpop.permute.xlu0 %463
  %467 = vset.pattern.permute.xlu0 0
  %468 = vperm.xlu0 %467, %v450
  %v469 = vpop.permute.xlu0 %468
  %vm471 = vcmask 523264
  %v473 = vsel %vm471, %v443, 0
  %v476 = vsel %vm471, %v444, 0
  %v479 = vsel %vm471, %v445, 0
  %v482 = vsel %vm471, %v446, 0
  %484 = vmatprep.subr.mxu0 0.0
  %485 = vmatpush1.msra.mxu0 %v431
  %486 = vmatprep.subr.mxu0 0.0
  %487 = vmatpush1.msra.mxu0 %v432
  %488 = vmatprep.subr.mxu0 0.0
  %489 = vmatpush1.msra.mxu0 %v433
  %490 = vmatprep.subr.mxu0 0.0
  %491 = vmatpush1.msra.mxu0 %v434
  %492 = vmatprep.subr.mxu0 0.0
  %493 = vmatpush1.msra.mxu0 %v435
  %494 = vmatprep.subr.mxu0 0.0
  %495 = vmatpush1.msra.mxu0 %v436
  %496 = vmatprep.subr.mxu0 0.0
  %497 = vmatpush1.msra.mxu0 %v437
  %498 = vmatprep.subr.mxu0 0.0
  %499 = vmatpush1.msra.mxu0 %v438
  %500 = vmatprep.subr.mxu0 0.0
  %501 = vmatpush1.msra.mxu0 0.0
  %502 = vmatprep.subr.mxu0 0.0
  %503 = vmatpush1.msra.mxu0 0.0
  %504 = vmatprep.subr.mxu0 0.0
  %505 = vmatpush1.msra.mxu0 0.0
  %506 = vmatprep.subr.mxu0 0.0
  %507 = vmatpush1.msra.mxu0 0.0
  %508 = vmatprep.subr.mxu0 0.0
  %509 = vmatpush1.msra.mxu0 0.0
  %510 = vmatprep.subr.mxu0 0.0
  %511 = vmatpush1.msra.mxu0 0.0
  %512 = vmatprep.subr.mxu0 0.0
  %513 = vmatpush1.msra.mxu0 0.0
  %514 = vmatprep.subr.mxu0 0.0
  %515 = vmatpush1.msra.mxu0 0.0
  %516 = vmatprep.subr.mxu0 0.0
  %517 = vmatpush1.msra.mxu0 0.0
  %518 = vmatprep.subr.mxu0 0.0
  %519 = vmatpush1.msra.mxu0 0.0
  %520 = vmatprep.subr.mxu0 0.0
  %521 = vmatpush1.msra.mxu0 0.0
  %522 = vmatprep.subr.mxu0 0.0
  %523 = vmatpush1.msra.mxu0 0.0
  %524 = vmatprep.subr.mxu0 0.0
  %525 = vmatpush1.msra.mxu0 0.0
  %526 = vmatprep.subr.mxu0 0.0
  %527 = vmatpush1.msra.mxu0 0.0
  %528 = vmatprep.subr.mxu0 0.0
  %529 = vmatpush1.msra.mxu0 0.0
  %530 = vmatprep.subr.mxu0 0.0
  %531 = vmatpush1.msra.mxu0 0.0
  %532 = vmatprep.subr.mxu0 0.0
  %533 = vmatpush1.msra.mxu0 0.0
  %534 = vmatprep.subr.mxu0 0.0
  %535 = vmatpush1.msra.mxu0 0.0
  %536 = vmatprep.subr.mxu0 0.0
  %537 = vmatpush1.msra.mxu0 0.0
  %538 = vmatprep.subr.mxu0 0.0
  %539 = vmatpush1.msra.mxu0 0.0
  %540 = vmatprep.subr.mxu0 0.0
  %541 = vmatpush1.msra.mxu0 0.0
  %542 = vmatprep.subr.mxu0 0.0
  %543 = vmatpush1.msra.mxu0 0.0
  %544 = vmatprep.subr.mxu0 0.0
  %545 = vmatpush1.msra.mxu0 0.0
  %546 = vmatprep.subr.mxu0 0.0
  %547 = vmatpush1.msra.mxu0 0.0
  %548 = vmatprep.mubr.f32.mxu0 0.0
  %549 = vmatmul.mubr.f32.gmra.mrb[0].mxu0 %v473
  %v550 = vpop.f32.mrb[0].mxu0
  %v551 = vadd.f32 %v454, %v550
  %v552 = vpop.f32.mrb[0].mxu0
  %553 = vmatprep.mubr.f32.mxu0 0.0
  %554 = vmatmul.mubr.f32.gmra.mrb[0].mxu0 %v476
  %v555 = vpop.f32.mrb[0].mxu0
  %v556 = vadd.f32 %v459, %v555
  %v557 = vpop.f32.mrb[0].mxu0
  %558 = vmatprep.mubr.f32.mxu0 0.0
  %559 = vmatmul.mubr.f32.gmra.mrb[0].mxu0 %v479
  %v560 = vpop.f32.mrb[0].mxu0
  %v561 = vadd.f32 %v464, %v560
  %v562 = vpop.f32.mrb[0].mxu0
  %563 = vmatprep.mubr.f32.mxu0 0.0
  %564 = vmatmul.mubr.f32.gmra.mrb[0].mxu0 %v482
  %v565 = vpop.f32.mrb[0].mxu0
  %v566 = vadd.f32 %v469, %v565
  %v567 = vpop.f32.mrb[0].mxu0
  %568 = vdwg.mxu0
  %v569 = vmax.f32 %v551, 0.0
  %v570 = vmax.f32 %v556, 0.0
  %v571 = vmax.f32 %v561, 0.0
  %v572 = vmax.f32 %v566, 0.0
  %v573 = vld [vmem:[%s9] sm:$0xf]
  %v574 = vld [vmem:[%s9 + $0x4] sm:$0xf]
  %v575 = vunpack.c.l.bf16 %v573
  %v576 = vunpack.c.l.bf16 %v574
  %v577 = vld [vmem:[%s10] sm:$0xff]
  %v578 = vld [vmem:[%s10 + $0x8] sm:$0xff]
  %580 = vset.pattern.permute.xlu0 0
  %581 = vperm.xlu0 %580, %v577
  %v582 = vpop.permute.xlu0 %581
  %585 = vset.pattern.permute.xlu0 0
  %586 = vperm.xlu0 %585, %v578
  %v587 = vpop.permute.xlu0 %586
  %v590 = vsel %vm116, %v575, 0
  %v593 = vsel %vm116, %v576, 0
  %595 = vmatprep.subr.mxu0 0.0
  %596 = vmatpush1.msra.mxu0 %v569
  %597 = vmatprep.subr.mxu0 0.0
  %598 = vmatpush1.msra.mxu0 %v570
  %599 = vmatprep.subr.mxu0 0.0
  %600 = vmatpush1.msra.mxu0 %v571
  %601 = vmatprep.subr.mxu0 0.0
  %602 = vmatpush1.msra.mxu0 %v572
  %603 = vmatprep.subr.mxu0 0.0
  %604 = vmatpush1.msra.mxu0 0.0
  %605 = vmatprep.subr.mxu0 0.0
  %606 = vmatpush1.msra.mxu0 0.0
  %607 = vmatprep.subr.mxu0 0.0
  %608 = vmatpush1.msra.mxu0 0.0
  %609 = vmatprep.subr.mxu0 0.0
  %610 = vmatpush1.msra.mxu0 0.0
  %611 = vmatprep.subr.mxu0 0.0
  %612 = vmatpush1.msra.mxu0 0.0
  %613 = vmatprep.subr.mxu0 0.0
  %614 = vmatpush1.msra.mxu0 0.0
  %615 = vmatprep.subr.mxu0 0.0
  %616 = vmatpush1.msra.mxu0 0.0
  %617 = vmatprep.subr.mxu0 0.0
  %618 = vmatpush1.msra.mxu0 0.0
  %619 = vmatprep.subr.mxu0 0.0
  %620 = vmatpush1.msra.mxu0 0.0
  %621 = vmatprep.subr.mxu0 0.0
  %622 = vmatpush1.msra.mxu0 0.0
  %623 = vmatprep.subr.mxu0 0.0
  %624 = vmatpush1.msra.mxu0 0.0
  %625 = vmatprep.subr.mxu0 0.0
  %626 = vmatpush1.msra.mxu0 0.0
  %627 = vmatprep.subr.mxu0 0.0
  %628 = vmatpush1.msra.mxu0 0.0
  %629 = vmatprep.subr.mxu0 0.0
  %630 = vmatpush1.msra.mxu0 0.0
  %631 = vmatprep.subr.mxu0 0.0
  %632 = vmatpush1.msra.mxu0 0.0
  %633 = vmatprep.subr.mxu0 0.0
  %634 = vmatpush1.msra.mxu0 0.0
  %635 = vmatprep.subr.mxu0 0.0
  %636 = vmatpush1.msra.mxu0 0.0
  %637 = vmatprep.subr.mxu0 0.0
  %638 = vmatpush1.msra.mxu0 0.0
  %639 = vmatprep.subr.mxu0 0.0
  %640 = vmatpush1.msra.mxu0 0.0
  %641 = vmatprep.subr.mxu0 0.0
  %642 = vmatpush1.msra.mxu0 0.0
  %643 = vmatprep.subr.mxu0 0.0
  %644 = vmatpush1.msra.mxu0 0.0
  %645 = vmatprep.subr.mxu0 0.0
  %646 = vmatpush1.msra.mxu0 0.0
  %647 = vmatprep.subr.mxu0 0.0
  %648 = vmatpush1.msra.mxu0 0.0
  %649 = vmatprep.subr.mxu0 0.0
  %650 = vmatpush1.msra.mxu0 0.0
  %651 = vmatprep.subr.mxu0 0.0
  %652 = vmatpush1.msra.mxu0 0.0
  %653 = vmatprep.subr.mxu0 0.0
  %654 = vmatpush1.msra.mxu0 0.0
  %655 = vmatprep.subr.mxu0 0.0
  %656 = vmatpush1.msra.mxu0 0.0
  %657 = vmatprep.subr.mxu0 0.0
  %658 = vmatpush1.msra.mxu0 0.0
  %659 = vmatprep.mubr.f32.mxu0 0.0
  %660 = vmatmul.mubr.f32.gmra.mrb[0].mxu0 %v590
  %v661 = vpop.f32.mrb[0].mxu0
  %v662 = vadd.f32 %v582, %v661
  %v663 = vpop.f32.mrb[0].mxu0
  %664 = vmatprep.mubr.f32.mxu0 0.0
  %665 = vmatmul.mubr.f32.gmra.mrb[0].mxu0 %v593
  %v666 = vpop.f32.mrb[0].mxu0
  %v667 = vadd.f32 %v587, %v666
  %v668 = vpop.f32.mrb[0].mxu0
  %669 = vdwg.mxu0
  %v670 = vmax.f32 %v662, 0.0
  %v671 = vmax.f32 %v667, 0.0
  %v672 = vld [vmem:[%s11] sm:$0xf]
  %v673 = vld [vmem:[%s11 + $0x4] sm:$0xf]
  %v674 = vld [vmem:[%s11 + $0x8] sm:$0xf]
  %v675 = vld [vmem:[%s11 + $0xc] sm:$0xf]
  %v676 = vunpack.c.l.bf16 %v672
  %v677 = vunpack.c.l.bf16 %v673
  %v678 = vunpack.c.l.bf16 %v674
  %v679 = vunpack.c.l.bf16 %v675
  %681 = vset.pattern.permute.xlu0 0
  %682 = vperm.xlu0 %681, %v676
  %v683 = vpop.permute.xlu0 %682
  %686 = vset.pattern.permute.xlu0 0
  %687 = vperm.xlu0 %686, %v677
  %v688 = vpop.permute.xlu0 %687
  %691 = vset.pattern.permute.xlu0 0
  %692 = vperm.xlu0 %691, %v678
  %v693 = vpop.permute.xlu0 %692
  %696 = vset.pattern.permute.xlu0 0
  %697 = vperm.xlu0 %696, %v679
  %v698 = vpop.permute.xlu0 %697
  %v700 = vmul.f32 %v64, %v683
  %v701 = vmul.f32 %v65, %v688
  %v702 = vmul.f32 %v66, %v693
  %v703 = vmul.f32 %v67, %v698
  %v704 = vadd.f32 %v700, %v701
  %v705 = vadd.f32 %v704, %v702
  %v706 = vadd.f32 %v705, %v703
  %v707 = vrot.slane %v706, 4
  %v708 = vadd.f32 %v706, %v707
  %v709 = vrot.slane %v708, 2
  %v710 = vadd.f32 %v708, %v709
  %v711 = vrot.slane %v710, 1
  %v712 = vadd.f32 %v710, %v711
  %v713 = vld [vmem:[%s12] sm:$0xf]
  %v714 = vld [vmem:[%s12 + $0x4] sm:$0xf]
  %v715 = vunpack.c.l.bf16 %v713
  %v716 = vunpack.c.l.bf16 %v714
  %718 = vset.pattern.permute.xlu0 0
  %719 = vperm.xlu0 %718, %v715
  %v720 = vpop.permute.xlu0 %719
  %723 = vset.pattern.permute.xlu0 0
  %724 = vperm.xlu0 %723, %v716
  %v725 = vpop.permute.xlu0 %724
  %v727 = vmul.f32 %v670, %v720
  %v728 = vmul.f32 %v671, %v725
  %v729 = vadd.f32 %v727, %v728
  %v730 = vrot.slane %v729, 4
  %v731 = vadd.f32 %v729, %v730
  %v732 = vrot.slane %v731, 2
  %v733 = vadd.f32 %v731, %v732
  %v734 = vrot.slane %v733, 1
  %v735 = vadd.f32 %v733, %v734
  %v736 = vadd.f32 %v712, %v735
  %s737 = sld [smem:[#allocation2]]
  %v738 = vstv %s737
  %v739 = vadd.f32 %v736, %v738
  %v740 = vxor.u32 %v739, 2147483648
  %v741 = vmul.f32 %v740, 1.442695
  %v742 = vpow.pop %v741
  %v743 = vadd.f32 %v742, 1.0
  %v744 = vrcp.pop %v743
  %v745 = vmul.f32 1.0, %v744
  %746 = vst [vmem:[%s14] sm:$0x1] %v745
  // Predicated region
  $region58: #{ncf_forward.1} parent=0 // pred_check
    _
  $region59: #{ncf_forward.1} parent=0 // pred_check_branch
    %748 = sbr.rel (0) target = $region61
  $region60: #{ncf_forward.1} parent=0 // pred_region
    _
  $region61: #{ncf_forward.1} parent=0 // pred_fallthru
    _
  // Predicated region
  $region62: #{ncf_forward.1} parent=0 // pred_check
    _
  $region63: #{ncf_forward.1} parent=0 // pred_check_branch
    %750 = sbr.rel (0) target = $region65
  $region64: #{ncf_forward.1} parent=0 // pred_region
    _
  $region65: #{ncf_forward.1} parent=0 // pred_fallthru
    _

</llo_original>
